<compile_context>
chip_gen: v7x
topology: tpu7x:2x2x1
jax: 0.10.0
libtpu: 0.0.40
codegen_flags: <defaults>
</compile_context>

<pallas_src>
import jax
import jax.numpy as jnp
from jax.experimental import pallas as pl
from jax.experimental.pallas import tpu as pltpu


def _attention_kernel(x_ref, wblk_ref, b_ref, e_ref, m_ref, o_ref):
    """One batch tile.

    x_ref    : (TB, S*F)  input tile, flattened (step, feature) -> lane-dense
    wblk_ref : (S*F, S)   block-diagonal weight, kron(I_S, W)   (compute dtype)
    b_ref    : (1, S)     step bias                             (f32)
    e_ref    : (S, S*F)   expand matrix, E[s, s*F+f] = 1        (f32)
    m_ref    : (S*F, F)   segment-sum matrix, M[s*F+f, f] = 1   (compute dtype)
    o_ref    : (TB, F)    output tile
    """
    x2d = x_ref[...]                      # storage/compute dtype (f32 or bf16)
    cdt = x2d.dtype

    # ---- scores: eij[b,s] = sum_f x[b,s,f] * w[f]  (MXU, f32 accumulate) ----
    eij = jnp.dot(x2d, wblk_ref[...], preferred_element_type=jnp.float32)   # (TB, S)
    eij = jnp.tanh(eij + b_ref[...])                                        # bias, then tanh

    # ---- softmax over steps (eij in [-1,1] -> no max-subtract needed) ------
    a = jnp.exp(eij)                                                        # (TB, S)
    denom = jnp.sum(a, axis=1, keepdims=True)                               # (TB, 1)
    a = a * pl.reciprocal(denom, approx=True) + 1e-10   # +1e-10 AFTER normalisation

    # ---- weighted sum over steps: expand a to x's lane layout, all on MXU ---
    a_exp = jnp.dot(a, e_ref[...], preferred_element_type=jnp.float32)      # (TB, S*F)
    y = x2d * a_exp.astype(cdt)                                             # lane-dense VPU
    out = jnp.dot(y, m_ref[...], preferred_element_type=jnp.float32)        # (TB, F)
    o_ref[...] = out.astype(o_ref.dtype)


def _vmem_capacity_bytes():
    """Per-core VMEM capacity; conservative fallback if the query fails."""
    try:
        cap = getattr(pltpu.get_tpu_info(), "vmem_capacity_bytes", None)
        if cap:
            return int(cap)
    except Exception:
        pass
    return 64 << 20   # v7x per-TC value -- safe lower bound for all generations


def _plan_tiles(B, S, F, itemsize, batch_tile=None):
    """Pick (batch_tile, grid_steps, vmem_limit_bytes) from a generation-aware
    VMEM budget.  No divisibility requirement on B (wrapper pads the batch)."""
    def rup(v, m):
        return -(-v // m) * m

    def cdv(a, b):
        return -(-a // b)

    # dtype-aware sublane alignment: 8 rows f32, 16 bf16, 32 int8/fp8
    align = max(8, 32 // itemsize)

    cap_bytes = _vmem_capacity_bytes()
    # <= ~45% of per-core VMEM, and <= 40 MiB so the plan also fits v7x's 64 MiB
    budget = min(int(0.45 * cap_bytes), 40 << 20)

    f_pad = rup(F, 128)
    # bytes per batch row: double-buffered x tile + f32 a_exp + y (compute dtype)
    # + small (TB,S) f32 temps + double-buffered lane-padded f32 output tile
    per_b = S * F * (2 * itemsize + 4 + itemsize) + 2 * S * 4 + 2 * f_pad * 4
    consts = S * F * (S + F) * itemsize + (S * S * F + S * 128) * 4

    if batch_tile is not None:
        tb = max(align, rup(int(batch_tile), align))
    else:
        cap_rows = max(align, (budget - consts) // per_b)
        tb = max(align, min((cap_rows // align) * align, 4096, rup(B, align)))
        steps = cdv(B, tb)
        # guarantee >= 2 grid steps when B is big enough (v7x megacore sharding)
        if steps == 1 and B > align:
            steps = 2
        # prefer an even step count so both TCs stay busy on the last wave
        if steps > 1 and steps % 2 == 1:
            tb_try = max(align, rup(cdv(B, steps + 1), align))
            if cdv(B, tb_try) == steps + 1:
                steps += 1
        # rebalance: smallest aligned tile that keeps `steps` steps (min padding)
        tb = max(align, rup(cdv(B, steps), align))

    steps = cdv(B, tb)
    needed = tb * per_b + consts
    vmem_limit = min(int(0.92 * cap_bytes), max(needed + (8 << 20), 32 << 20))
    return tb, steps, vmem_limit


def attention_forward(x, weight, bias=None, *, batch_tile=None, vmem_limit_bytes=None):
    """x: (B, S, F), weight: (F, 1), bias: (S,) or None -> (B, F)."""
    B, S, F = x.shape
    assert weight.shape == (F, 1)
    if bias is None:
        bias = jnp.zeros((S,), dtype=jnp.float32)   # bias=False constructor path
    assert bias.shape == (S,)

    cdt = x.dtype
    f32 = jnp.float32

    # Free, contiguous trailing-dim merge in HBM -> lane-dense kernel input.
    x2d = x.reshape(B, S * F)

    # Constant kron matrices, pre-cast to the kernel compute dtype where they
    # meet x on the MXU (no per-grid-step casts inside the kernel).
    eye_s = jnp.eye(S, dtype=f32)
    wblk = jnp.kron(eye_s, weight.astype(f32)).astype(cdt)                       # (S*F, S)
    e_mat = jnp.kron(eye_s, jnp.ones((1, F), f32))                               # (S, S*F), f32
    m_mat = jnp.kron(jnp.ones((S, 1), f32), jnp.eye(F, dtype=f32)).astype(cdt)   # (S*F, F)
    b2d = bias.astype(f32).reshape(1, S)

    itemsize = jnp.dtype(cdt).itemsize
    tb, n_steps, vmem_limit = _plan_tiles(B, S, F, itemsize, batch_tile)
    if vmem_limit_bytes is not None:
        vmem_limit = int(vmem_limit_bytes)

    # Pad the batch up to a multiple of the tile; rows are independent so
    # zero-padding is trivially correct (padded rows are sliced off below).
    b_pad = n_steps * tb
    if b_pad != B:
        x2d = jnp.pad(x2d, ((0, b_pad - B), (0, 0)))

    # TODO(synk): optional `mask` argument of the PyTorch forward not implemented
    # (mask=None path only).
    out = pl.pallas_call(
        _attention_kernel,
        out_shape=jax.ShapeDtypeStruct((b_pad, F), cdt),
        grid_spec=pltpu.PrefetchScalarGridSpec(
            num_scalar_prefetch=0,
            grid=(n_steps,),
            in_specs=[
                pl.BlockSpec((tb, S * F), lambda i: (i, 0)),
                pl.BlockSpec((S * F, S), lambda i: (0, 0)),
                pl.BlockSpec((1, S), lambda i: (0, 0)),
                pl.BlockSpec((S, S * F), lambda i: (0, 0)),
                pl.BlockSpec((S * F, F), lambda i: (0, 0)),
            ],
            out_specs=pl.BlockSpec((tb, F), lambda i: (i, 0)),
        ),
        compiler_params=pltpu.CompilerParams(
            dimension_semantics=("parallel",),
            vmem_limit_bytes=int(vmem_limit),
        ),
    )(x2d, wblk, b2d, e_mat, m_mat)

    return out if b_pad == B else out[:B]


def reference_forward(x, weight, bias):
    """Pure-JAX reference faithful to the PyTorch module (exact f32 math)."""
    B, S, F = x.shape
    xf = x.astype(jnp.float32)
    eij = jnp.dot(xf.reshape(-1, F), weight.astype(jnp.float32),
                  precision=jax.lax.Precision.HIGHEST).reshape(B, S)
    eij = jnp.tanh(eij + bias.astype(jnp.float32)[None, :])
    a = jnp.exp(eij)
    a = a / jnp.sum(a, axis=1, keepdims=True) + 1e-10
    return jnp.sum(xf * a[:, :, None], axis=1).astype(x.dtype)


if __name__ == "__main__":
    # Small shapes consistent with the module: batch=2, step_dim=8, feature_dim=32
    B, S, F = 2, 8, 32

    key = jax.random.PRNGKey(0)
    kx, kw, kb = jax.random.split(key, 3)

    x = jax.random.normal(kx, (B, S, F), dtype=jnp.float32)

    # xavier_uniform for a (feature_dim, 1) weight: bound = sqrt(6 / (F + 1))
    bound = (6.0 / (F + 1)) ** 0.5
    weight = jax.random.uniform(kw, (F, 1), dtype=jnp.float32,
                                minval=-bound, maxval=bound)
    # non-zero bias to exercise the bias-add path
    bias = 0.1 * jax.random.normal(kb, (S,), dtype=jnp.float32)

    out = attention_forward(x, weight, bias)
    out = jax.block_until_ready(out)

    ref = reference_forward(x, weight, bias)
    assert out.shape == (B, F)
    # 3e-3 tolerance: the kernel uses the EUP approximate reciprocal for the
    # softmax denominator; all other f32-path math is f32-accurate.
    assert jnp.allclose(out, ref, atol=3e-3, rtol=3e-3), "mismatch vs reference"

    # Exercise the non-divisible / padded-batch path as well (B=13 -> tile 16).
    x2 = jax.random.normal(jax.random.PRNGKey(1), (13, S, F), dtype=jnp.float32)
    out2 = jax.block_until_ready(attention_forward(x2, weight, bias))
    ref2 = reference_forward(x2, weight, bias)
    assert out2.shape == (13, F)
    assert jnp.allclose(out2, ref2, atol=3e-3, rtol=3e-3), "mismatch (padded batch)"

    print("KERNEL_OK")
</pallas_src>

<mosaic_0001>
module attributes {stable_mosaic.version = 11 : i64} {
  func.func @_attention_kernel(%arg0: i32, %arg1: memref<8x256xf32, #tpu.memory_space<vmem>>, %arg2: memref<256x8xf32, #tpu.memory_space<vmem>>, %arg3: memref<1x8xf32, #tpu.memory_space<vmem>>, %arg4: memref<8x256xf32, #tpu.memory_space<vmem>>, %arg5: memref<256x32xf32, #tpu.memory_space<vmem>>, %arg6: memref<8x32xf32, #tpu.memory_space<vmem>>) attributes {dimension_semantics = [#tpu.dimension_semantics<parallel>], iteration_bounds = array<i64: 1>, scalar_prefetch = 0 : i64, scratch_operands = 0 : i64, tpu.core_type = #tpu.core_type<tc>, window_params = [{transform_indices = @transform_0, window_bounds = array<i64: 8, 256>}, {pipeline_mode = #tpu.pipeline_mode<synchronous>, transform_indices = @transform_1, window_bounds = array<i64: 256, 8>}, {pipeline_mode = #tpu.pipeline_mode<synchronous>, transform_indices = @transform_2, window_bounds = array<i64: 1, 8>}, {pipeline_mode = #tpu.pipeline_mode<synchronous>, transform_indices = @transform_3, window_bounds = array<i64: 8, 256>}, {pipeline_mode = #tpu.pipeline_mode<synchronous>, transform_indices = @transform_4, window_bounds = array<i64: 256, 32>}, {transform_indices = @transform_5, window_bounds = array<i64: 8, 32>}]} {
    %c0 = arith.constant 0 : index
    %c0_0 = arith.constant 0 : index
    %0 = vector.load %arg1[%c0, %c0_0] : memref<8x256xf32, #tpu.memory_space<vmem>>, vector<8x256xf32>
    %c0_1 = arith.constant 0 : index
    %c0_2 = arith.constant 0 : index
    %1 = vector.load %arg2[%c0_1, %c0_2] : memref<256x8xf32, #tpu.memory_space<vmem>>, vector<256x8xf32>
    %cst = arith.constant dense<0.000000e+00> : vector<8x8xf32>
    %2 = tpu.matmul %0, %1, %cst {dimension_numbers = #tpu.dot_dimension_numbers<[1], [0], [0], [1], [0, 0, 1, 1], [], []>} : vector<8x256xf32>, vector<256x8xf32>, vector<8x8xf32> -> vector<8x8xf32>
    %c0_3 = arith.constant 0 : index
    %c0_4 = arith.constant 0 : index
    %3 = vector.load %arg3[%c0_3, %c0_4] : memref<1x8xf32, #tpu.memory_space<vmem>>, vector<1x8xf32>
    %4 = vector.broadcast %3 : vector<1x8xf32> to vector<8x8xf32>
    %5 = arith.addf %2, %4 : vector<8x8xf32>
    %6 = math.tanh %5 : vector<8x8xf32>
    %7 = math.exp %6 : vector<8x8xf32>
    %cst_5 = arith.constant dense<0.000000e+00> : vector<8xf32>
    %8 = vector.multi_reduction <add>, %7, %cst_5 [1] : vector<8x8xf32> to vector<8xf32>
    %9 = vector.shape_cast %8 : vector<8xf32> to vector<8x1xf32>
    %10 = tpu.reciprocal %9 {approx = true} : vector<8x1xf32> -> vector<8x1xf32>
    %11 = vector.broadcast %10 : vector<8x1xf32> to vector<8x8xf32>
    %12 = arith.mulf %7, %11 : vector<8x8xf32>
    %cst_6 = arith.constant 1.000000e-10 : f32
    %13 = vector.broadcast %cst_6 : f32 to vector<8x8xf32>
    %14 = arith.addf %12, %13 : vector<8x8xf32>
    %c0_7 = arith.constant 0 : index
    %c0_8 = arith.constant 0 : index
    %15 = vector.load %arg4[%c0_7, %c0_8] : memref<8x256xf32, #tpu.memory_space<vmem>>, vector<8x256xf32>
    %cst_9 = arith.constant dense<0.000000e+00> : vector<8x256xf32>
    %16 = tpu.matmul %14, %15, %cst_9 {dimension_numbers = #tpu.dot_dimension_numbers<[1], [0], [0], [1], [0, 0, 1, 1], [], []>} : vector<8x8xf32>, vector<8x256xf32>, vector<8x256xf32> -> vector<8x256xf32>
    %17 = arith.mulf %0, %16 : vector<8x256xf32>
    %c0_10 = arith.constant 0 : index
    %c0_11 = arith.constant 0 : index
    %18 = vector.load %arg5[%c0_10, %c0_11] : memref<256x32xf32, #tpu.memory_space<vmem>>, vector<256x32xf32>
    %cst_12 = arith.constant dense<0.000000e+00> : vector<8x32xf32>
    %19 = tpu.matmul %17, %18, %cst_12 {dimension_numbers = #tpu.dot_dimension_numbers<[1], [0], [0], [1], [0, 0, 1, 1], [], []>} : vector<8x256xf32>, vector<256x32xf32>, vector<8x32xf32> -> vector<8x32xf32>
    %c0_13 = arith.constant 0 : index
    %c0_14 = arith.constant 0 : index
    %20 = vector.load %arg6[%c0_13, %c0_14] : memref<8x32xf32, #tpu.memory_space<vmem>>, vector<8x32xf32>
    tpu.vector_store %arg6[%c0_13, %c0_14], %19 {strides = array<i32>} : memref<8x32xf32, #tpu.memory_space<vmem>>, vector<8x32xf32>,
    return
  }
  func.func @transform_0(%arg0: i32) -> (i32, i32) {
    %c0_i32 = arith.constant 0 : i32
    %c0_i32_0 = arith.constant 0 : i32
    return %arg0, %c0_i32 : i32, i32
  }
  func.func @transform_1(%arg0: i32) -> (i32, i32) {
    %c0_i32 = arith.constant 0 : i32
    %c0_i32_0 = arith.constant 0 : i32
    %c0_i32_1 = arith.constant 0 : i32
    return %c0_i32, %c0_i32_0 : i32, i32
  }
  func.func @transform_2(%arg0: i32) -> (i32, i32) {
    %c0_i32 = arith.constant 0 : i32
    %c0_i32_0 = arith.constant 0 : i32
    %c0_i32_1 = arith.constant 0 : i32
    return %c0_i32, %c0_i32_0 : i32, i32
  }
  func.func @transform_3(%arg0: i32) -> (i32, i32) {
    %c0_i32 = arith.constant 0 : i32
    %c0_i32_0 = arith.constant 0 : i32
    %c0_i32_1 = arith.constant 0 : i32
    return %c0_i32, %c0_i32_0 : i32, i32
  }
  func.func @transform_4(%arg0: i32) -> (i32, i32) {
    %c0_i32 = arith.constant 0 : i32
    %c0_i32_0 = arith.constant 0 : i32
    %c0_i32_1 = arith.constant 0 : i32
    return %c0_i32, %c0_i32_0 : i32, i32
  }
  func.func @transform_5(%arg0: i32) -> (i32, i32) {
    %c0_i32 = arith.constant 0 : i32
    %c0_i32_0 = arith.constant 0 : i32
    return %arg0, %c0_i32 : i32, i32
  }
}

</mosaic_0001>

<llo_original>
// kernel: tpu_custom_call.1
$region0: #{tpu_custom_call.1}
  #allocation0 [shape = 'u32[]', space=smem, size = 0x4, offset = 0x4, fixed_abs, tag = 'smem constant byte address 0x4 - core index']
  #allocation1 [shape = 'u32[144,128]{1,0:T(1,128)}', space=vmem, size = 0x12000, scoped, tag = 'internal scratch']
  %s0 = inlined_call_operand.vmem [shape: f32[8,256], index: 0, kind: input, shape index: {}]
  %s1 = inlined_call_operand.vmem [shape: f32[256,8], index: 1, kind: input, shape index: {}]
  %s2 = inlined_call_operand.vmem [shape: f32[1,8], index: 2, kind: input, shape index: {}]
  %s3 = inlined_call_operand.vmem [shape: f32[8,256], index: 3, kind: input, shape index: {}]
  %s4 = inlined_call_operand.vmem [shape: f32[256,32], index: 4, kind: input, shape index: {}]
  %s5 = inlined_call_operand.hbm [shape: f32[8,32], index: 5, kind: output, shape index: {}]
  %s6 = sld [smem:[#allocation0]]
  $region30: #{tpu_custom_call.1} parent=0
    _
  %s8 = ssub.s32 1, %s6
  %s9 = scalar_select 0, %s8, %s6
  $region1: #{tpu_custom_call.1} parent=0
    #allocation2 [shape = 'u8[4096]{0}', space=vmem, size = 0x1000, scoped, tag = 'output window, operand 0, single buffered']
    #allocation3 [shape = 's32[1]{0}', space=sflag, size = 0x4, scoped, tag = 'scoped memory for tpu_custom_call.1']
    %10 = vsyncpa [#allocation3], 0
    // Predicated region
    $region2: #{tpu_custom_call.1} parent=1 // pred_check
      _
    $region3: #{tpu_custom_call.1} parent=1 // pred_check_branch
      %12 = sbr.rel (0) target = $region5
    $region4: #{tpu_custom_call.1} parent=1 // pred_region
      _
    $region5: #{tpu_custom_call.1} parent=1 // pred_fallthru
      _
    // Predicated region
    $region6: #{tpu_custom_call.1} parent=1 // pred_check
      _
    $region7: #{tpu_custom_call.1} parent=1 // pred_check_branch
      %14 = sbr.rel (0) target = $region9
    $region8: #{tpu_custom_call.1} parent=1 // pred_region
      _
    $region9: #{tpu_custom_call.1} parent=1 // pred_fallthru
      _
    // Predicated region
    $region10: #{tpu_custom_call.1} parent=1 // pred_check
      _
    $region11: #{tpu_custom_call.1} parent=1 // pred_check_branch
      %16 = sbr.rel (0) target = $region13
    $region12: #{tpu_custom_call.1} parent=1 // pred_region
      _
    $region13: #{tpu_custom_call.1} parent=1 // pred_fallthru
      _
    // Predicated region
    $region14: #{tpu_custom_call.1} parent=1 // pred_check
      _
    $region15: #{tpu_custom_call.1} parent=1 // pred_check_branch
      %18 = sbr.rel (0) target = $region17
    $region16: #{tpu_custom_call.1} parent=1 // pred_region
      _
    $region17: #{tpu_custom_call.1} parent=1 // pred_fallthru
      _
    // Predicated region
    $region18: #{tpu_custom_call.1} parent=1 // pred_check
      _
    $region19: #{tpu_custom_call.1} parent=1 // pred_check_branch
      %20 = sbr.rel (0) target = $region21
    $region20: #{tpu_custom_call.1} parent=1 // pred_region
      _
    $region21: #{tpu_custom_call.1} parent=1 // pred_fallthru
      _
    %v21 = vld [vmem:[%s0] sm:$0xff]
    %v22 = vld [vmem:[%s0 + $0x8] sm:$0xff]
    %v23 = vld [vmem:[%s1] sm:$0xff]
    %v24 = vld [vmem:[%s1 + $0x8] sm:$0xff]
    %v25 = vld [vmem:[%s1 + $0x10] sm:$0xff]
    %v26 = vld [vmem:[%s1 + $0x18] sm:$0xff]
    %v27 = vld [vmem:[%s1 + $0x20] sm:$0xff]
    %v28 = vld [vmem:[%s1 + $0x28] sm:$0xff]
    %v29 = vld [vmem:[%s1 + $0x30] sm:$0xff]
    %v30 = vld [vmem:[%s1 + $0x38] sm:$0xff]
    %v31 = vld [vmem:[%s1 + $0x40] sm:$0xff]
    %v32 = vld [vmem:[%s1 + $0x48] sm:$0xff]
    %v33 = vld [vmem:[%s1 + $0x50] sm:$0xff]
    %v34 = vld [vmem:[%s1 + $0x58] sm:$0xff]
    %v35 = vld [vmem:[%s1 + $0x60] sm:$0xff]
    %v36 = vld [vmem:[%s1 + $0x68] sm:$0xff]
    %v37 = vld [vmem:[%s1 + $0x70] sm:$0xff]
    %v38 = vld [vmem:[%s1 + $0x78] sm:$0xff]
    %v39 = vld [vmem:[%s1 + $0x80] sm:$0xff]
    %v40 = vld [vmem:[%s1 + $0x88] sm:$0xff]
    %v41 = vld [vmem:[%s1 + $0x90] sm:$0xff]
    %v42 = vld [vmem:[%s1 + $0x98] sm:$0xff]
    %v43 = vld [vmem:[%s1 + $0xa0] sm:$0xff]
    %v44 = vld [vmem:[%s1 + $0xa8] sm:$0xff]
    %v45 = vld [vmem:[%s1 + $0xb0] sm:$0xff]
    %v46 = vld [vmem:[%s1 + $0xb8] sm:$0xff]
    %v47 = vld [vmem:[%s1 + $0xc0] sm:$0xff]
    %v48 = vld [vmem:[%s1 + $0xc8] sm:$0xff]
    %v49 = vld [vmem:[%s1 + $0xd0] sm:$0xff]
    %v50 = vld [vmem:[%s1 + $0xd8] sm:$0xff]
    %v51 = vld [vmem:[%s1 + $0xe0] sm:$0xff]
    %v52 = vld [vmem:[%s1 + $0xe8] sm:$0xff]
    %v53 = vld [vmem:[%s1 + $0xf0] sm:$0xff]
    %v54 = vld [vmem:[%s1 + $0xf8] sm:$0xff]
    %v55 = vld [vmem:[%s2] sm:$0x1]
    %v57 = vlaneseq
    %v58 = vshrl.u32 %v57, 7
    %v59 = vsub.s32 0, %v58
    %v60 = vrot.slane %v55, %v59
    %62 = vmatprep.subr.mxu0 0.0
    %63 = vmatpush1.msra.mxu0 %v23
    %64 = vmatprep.subr.mxu0 0.0
    %65 = vmatpush1.msra.mxu0 %v24
    %66 = vmatprep.subr.mxu0 0.0
    %67 = vmatpush1.msra.mxu0 %v25
    %68 = vmatprep.subr.mxu0 0.0
    %69 = vmatpush1.msra.mxu0 %v26
    %70 = vmatprep.subr.mxu0 0.0
    %71 = vmatpush1.msra.mxu0 %v27
    %72 = vmatprep.subr.mxu0 0.0
    %73 = vmatpush1.msra.mxu0 %v28
    %74 = vmatprep.subr.mxu0 0.0
    %75 = vmatpush1.msra.mxu0 %v29
    %76 = vmatprep.subr.mxu0 0.0
    %77 = vmatpush1.msra.mxu0 %v30
    %78 = vmatprep.subr.mxu0 0.0
    %79 = vmatpush1.msra.mxu0 %v31
    %80 = vmatprep.subr.mxu0 0.0
    %81 = vmatpush1.msra.mxu0 %v32
    %82 = vmatprep.subr.mxu0 0.0
    %83 = vmatpush1.msra.mxu0 %v33
    %84 = vmatprep.subr.mxu0 0.0
    %85 = vmatpush1.msra.mxu0 %v34
    %86 = vmatprep.subr.mxu0 0.0
    %87 = vmatpush1.msra.mxu0 %v35
    %88 = vmatprep.subr.mxu0 0.0
    %89 = vmatpush1.msra.mxu0 %v36
    %90 = vmatprep.subr.mxu0 0.0
    %91 = vmatpush1.msra.mxu0 %v37
    %92 = vmatprep.subr.mxu0 0.0
    %93 = vmatpush1.msra.mxu0 %v38
    %94 = vmatprep.subr.mxu0 0.0
    %95 = vmatpush1.msra.mxu0 %v39
    %96 = vmatprep.subr.mxu0 0.0
    %97 = vmatpush1.msra.mxu0 %v40
    %98 = vmatprep.subr.mxu0 0.0
    %99 = vmatpush1.msra.mxu0 %v41
    %100 = vmatprep.subr.mxu0 0.0
    %101 = vmatpush1.msra.mxu0 %v42
    %102 = vmatprep.subr.mxu0 0.0
    %103 = vmatpush1.msra.mxu0 %v43
    %104 = vmatprep.subr.mxu0 0.0
    %105 = vmatpush1.msra.mxu0 %v44
    %106 = vmatprep.subr.mxu0 0.0
    %107 = vmatpush1.msra.mxu0 %v45
    %108 = vmatprep.subr.mxu0 0.0
    %109 = vmatpush1.msra.mxu0 %v46
    %110 = vmatprep.subr.mxu0 0.0
    %111 = vmatpush1.msra.mxu0 %v47
    %112 = vmatprep.subr.mxu0 0.0
    %113 = vmatpush1.msra.mxu0 %v48
    %114 = vmatprep.subr.mxu0 0.0
    %115 = vmatpush1.msra.mxu0 %v49
    %116 = vmatprep.subr.mxu0 0.0
    %117 = vmatpush1.msra.mxu0 %v50
    %118 = vmatprep.subr.mxu0 0.0
    %119 = vmatpush1.msra.mxu0 %v51
    %120 = vmatprep.subr.mxu0 0.0
    %121 = vmatpush1.msra.mxu0 %v52
    %122 = vmatprep.subr.mxu0 0.0
    %123 = vmatpush1.msra.mxu0 %v53
    %124 = vmatprep.subr.mxu0 0.0
    %125 = vmatpush1.msra.mxu0 %v54
    %126 = vmatprep.mubr.f32.mxu0 %v22
    %127 = vmatmul.mubr.f32.gmra.mrb[0].mxu0 %v21
    %v128 = vpop.f32.mrb[0].mxu0
    %v129 = vadd.f32 %v60, %v128
    %v130 = vpop.f32.mrb[0].mxu0
    %131 = vdwg.mxu0
    %v132 = vtanh.pop %v129
    %v133 = vmul.f32 %v132, 1.442695
    %v134 = vpow.pop %v133
    %vm135 = vcmask 64512
    %v136 = vsel %vm135, %v134, 0.0
    %137 = vadd.xlane.f32.xlu0 %v136
    %v138 = vpop.xlane.xlu0 %137
    %v139 = vrcp.pop %v138
    %v140 = vmul.f32 %v134, %v139
    %v141 = vadd.f32 %v140, 1e-10
    %v142 = vld [vmem:[%s3] sm:$0xff]
    %v143 = vld [vmem:[%s3 + $0x8] sm:$0xff]
    %v145 = vsel %vm135, %v141, 0
    %147 = vmatprep.subr.mxu0 %v143
    %148 = vmatpush1.msra.mxu0 %v142
    %149 = vmatprep.subr.mxu0 0.0
    %150 = vmatpush1.msra.mxu0 0.0
    %151 = vmatprep.subr.mxu0 0.0
    %152 = vmatpush1.msra.mxu0 0.0
    %153 = vmatprep.subr.mxu0 0.0
    %154 = vmatpush1.msra.mxu0 0.0
    %155 = vmatprep.subr.mxu0 0.0
    %156 = vmatpush1.msra.mxu0 0.0
    %157 = vmatprep.subr.mxu0 0.0
    %158 = vmatpush1.msra.mxu0 0.0
    %159 = vmatprep.subr.mxu0 0.0
    %160 = vmatpush1.msra.mxu0 0.0
    %161 = vmatprep.subr.mxu0 0.0
    %162 = vmatpush1.msra.mxu0 0.0
    %163 = vmatprep.subr.mxu0 0.0
    %164 = vmatpush1.msra.mxu0 0.0
    %165 = vmatprep.subr.mxu0 0.0
    %166 = vmatpush1.msra.mxu0 0.0
    %167 = vmatprep.subr.mxu0 0.0
    %168 = vmatpush1.msra.mxu0 0.0
    %169 = vmatprep.subr.mxu0 0.0
    %170 = vmatpush1.msra.mxu0 0.0
    %171 = vmatprep.subr.mxu0 0.0
    %172 = vmatpush1.msra.mxu0 0.0
    %173 = vmatprep.subr.mxu0 0.0
    %174 = vmatpush1.msra.mxu0 0.0
    %175 = vmatprep.subr.mxu0 0.0
    %176 = vmatpush1.msra.mxu0 0.0
    %177 = vmatprep.subr.mxu0 0.0
    %178 = vmatpush1.msra.mxu0 0.0
    %179 = vmatprep.subr.mxu0 0.0
    %180 = vmatpush1.msra.mxu0 0.0
    %181 = vmatprep.subr.mxu0 0.0
    %182 = vmatpush1.msra.mxu0 0.0
    %183 = vmatprep.subr.mxu0 0.0
    %184 = vmatpush1.msra.mxu0 0.0
    %185 = vmatprep.subr.mxu0 0.0
    %186 = vmatpush1.msra.mxu0 0.0
    %187 = vmatprep.subr.mxu0 0.0
    %188 = vmatpush1.msra.mxu0 0.0
    %189 = vmatprep.subr.mxu0 0.0
    %190 = vmatpush1.msra.mxu0 0.0
    %191 = vmatprep.subr.mxu0 0.0
    %192 = vmatpush1.msra.mxu0 0.0
    %193 = vmatprep.subr.mxu0 0.0
    %194 = vmatpush1.msra.mxu0 0.0
    %195 = vmatprep.subr.mxu0 0.0
    %196 = vmatpush1.msra.mxu0 0.0
    %197 = vmatprep.subr.mxu0 0.0
    %198 = vmatpush1.msra.mxu0 0.0
    %199 = vmatprep.subr.mxu0 0.0
    %200 = vmatpush1.msra.mxu0 0.0
    %201 = vmatprep.subr.mxu0 0.0
    %202 = vmatpush1.msra.mxu0 0.0
    %203 = vmatprep.subr.mxu0 0.0
    %204 = vmatpush1.msra.mxu0 0.0
    %205 = vmatprep.subr.mxu0 0.0
    %206 = vmatpush1.msra.mxu0 0.0
    %207 = vmatprep.subr.mxu0 0.0
    %208 = vmatpush1.msra.mxu0 0.0
    %209 = vmatprep.subr.mxu0 0.0
    %210 = vmatpush1.msra.mxu0 0.0
    %211 = vmatprep.mubr.f32.mxu0 0.0
    %212 = vmatmul.mubr.f32.gmra.mrb[0].mxu0 %v145
    %v213 = vpop.f32.mrb[0].mxu0
    %v214 = vadd.f32 0.0, %v213
    %v215 = vpop.f32.mrb[0].mxu0
    %v216 = vadd.f32 0.0, %v215
    %217 = vdwg.mxu0
    %v218 = vmul.f32 %v21, %v214
    %v219 = vmul.f32 %v22, %v216
    %v220 = vld [vmem:[%s4] sm:$0xff]
    %v221 = vld [vmem:[%s4 + $0x8] sm:$0xff]
    %v222 = vld [vmem:[%s4 + $0x10] sm:$0xff]
    %v223 = vld [vmem:[%s4 + $0x18] sm:$0xff]
    %v224 = vld [vmem:[%s4 + $0x20] sm:$0xff]
    %v225 = vld [vmem:[%s4 + $0x28] sm:$0xff]
    %v226 = vld [vmem:[%s4 + $0x30] sm:$0xff]
    %v227 = vld [vmem:[%s4 + $0x38] sm:$0xff]
    %v228 = vld [vmem:[%s4 + $0x40] sm:$0xff]
    %v229 = vld [vmem:[%s4 + $0x48] sm:$0xff]
    %v230 = vld [vmem:[%s4 + $0x50] sm:$0xff]
    %v231 = vld [vmem:[%s4 + $0x58] sm:$0xff]
    %v232 = vld [vmem:[%s4 + $0x60] sm:$0xff]
    %v233 = vld [vmem:[%s4 + $0x68] sm:$0xff]
    %v234 = vld [vmem:[%s4 + $0x70] sm:$0xff]
    %v235 = vld [vmem:[%s4 + $0x78] sm:$0xff]
    %v236 = vld [vmem:[%s4 + $0x80] sm:$0xff]
    %v237 = vld [vmem:[%s4 + $0x88] sm:$0xff]
    %v238 = vld [vmem:[%s4 + $0x90] sm:$0xff]
    %v239 = vld [vmem:[%s4 + $0x98] sm:$0xff]
    %v240 = vld [vmem:[%s4 + $0xa0] sm:$0xff]
    %v241 = vld [vmem:[%s4 + $0xa8] sm:$0xff]
    %v242 = vld [vmem:[%s4 + $0xb0] sm:$0xff]
    %v243 = vld [vmem:[%s4 + $0xb8] sm:$0xff]
    %v244 = vld [vmem:[%s4 + $0xc0] sm:$0xff]
    %v245 = vld [vmem:[%s4 + $0xc8] sm:$0xff]
    %v246 = vld [vmem:[%s4 + $0xd0] sm:$0xff]
    %v247 = vld [vmem:[%s4 + $0xd8] sm:$0xff]
    %v248 = vld [vmem:[%s4 + $0xe0] sm:$0xff]
    %v249 = vld [vmem:[%s4 + $0xe8] sm:$0xff]
    %v250 = vld [vmem:[%s4 + $0xf0] sm:$0xff]
    %v251 = vld [vmem:[%s4 + $0xf8] sm:$0xff]
    %252 = vmatprep.subr.mxu0 0.0
    %253 = vmatpush1.msra.mxu0 %v220
    %254 = vmatprep.subr.mxu0 0.0
    %255 = vmatpush1.msra.mxu0 %v221
    %256 = vmatprep.subr.mxu0 0.0
    %257 = vmatpush1.msra.mxu0 %v222
    %258 = vmatprep.subr.mxu0 0.0
    %259 = vmatpush1.msra.mxu0 %v223
    %260 = vmatprep.subr.mxu0 0.0
    %261 = vmatpush1.msra.mxu0 %v224
    %262 = vmatprep.subr.mxu0 0.0
    %263 = vmatpush1.msra.mxu0 %v225
    %264 = vmatprep.subr.mxu0 0.0
    %265 = vmatpush1.msra.mxu0 %v226
    %266 = vmatprep.subr.mxu0 0.0
    %267 = vmatpush1.msra.mxu0 %v227
    %268 = vmatprep.subr.mxu0 0.0
    %269 = vmatpush1.msra.mxu0 %v228
    %270 = vmatprep.subr.mxu0 0.0
    %271 = vmatpush1.msra.mxu0 %v229
    %272 = vmatprep.subr.mxu0 0.0
    %273 = vmatpush1.msra.mxu0 %v230
    %274 = vmatprep.subr.mxu0 0.0
    %275 = vmatpush1.msra.mxu0 %v231
    %276 = vmatprep.subr.mxu0 0.0
    %277 = vmatpush1.msra.mxu0 %v232
    %278 = vmatprep.subr.mxu0 0.0
    %279 = vmatpush1.msra.mxu0 %v233
    %280 = vmatprep.subr.mxu0 0.0
    %281 = vmatpush1.msra.mxu0 %v234
    %282 = vmatprep.subr.mxu0 0.0
    %283 = vmatpush1.msra.mxu0 %v235
    %284 = vmatprep.subr.mxu0 0.0
    %285 = vmatpush1.msra.mxu0 %v236
    %286 = vmatprep.subr.mxu0 0.0
    %287 = vmatpush1.msra.mxu0 %v237
    %288 = vmatprep.subr.mxu0 0.0
    %289 = vmatpush1.msra.mxu0 %v238
    %290 = vmatprep.subr.mxu0 0.0
    %291 = vmatpush1.msra.mxu0 %v239
    %292 = vmatprep.subr.mxu0 0.0
    %293 = vmatpush1.msra.mxu0 %v240
    %294 = vmatprep.subr.mxu0 0.0
    %295 = vmatpush1.msra.mxu0 %v241
    %296 = vmatprep.subr.mxu0 0.0
    %297 = vmatpush1.msra.mxu0 %v242
    %298 = vmatprep.subr.mxu0 0.0
    %299 = vmatpush1.msra.mxu0 %v243
    %300 = vmatprep.subr.mxu0 0.0
    %301 = vmatpush1.msra.mxu0 %v244
    %302 = vmatprep.subr.mxu0 0.0
    %303 = vmatpush1.msra.mxu0 %v245
    %304 = vmatprep.subr.mxu0 0.0
    %305 = vmatpush1.msra.mxu0 %v246
    %306 = vmatprep.subr.mxu0 0.0
    %307 = vmatpush1.msra.mxu0 %v247
    %308 = vmatprep.subr.mxu0 0.0
    %309 = vmatpush1.msra.mxu0 %v248
    %310 = vmatprep.subr.mxu0 0.0
    %311 = vmatpush1.msra.mxu0 %v249
    %312 = vmatprep.subr.mxu0 0.0
    %313 = vmatpush1.msra.mxu0 %v250
    %314 = vmatprep.subr.mxu0 0.0
    %315 = vmatpush1.msra.mxu0 %v251
    %316 = vmatprep.mubr.f32.mxu0 %v219
    %317 = vmatmul.mubr.f32.gmra.mrb[0].mxu0 %v218
    %v318 = vpop.f32.mrb[0].mxu0
    %v319 = vadd.f32 0.0, %v318
    %v320 = vpop.f32.mrb[0].mxu0
    %321 = vdwg.mxu0
    %vm322 = vcmask 261120
    %323 = vst.msk [vmem:[#allocation2] sm:$0xff] %vm322, %v319
    // Predicated region
    $region22: #{tpu_custom_call.1} parent=1 // pred_check
      _
    $region23: #{tpu_custom_call.1} parent=1 // pred_check_branch
      %325 = sbr.rel (0) target = $region25
    $region24: #{tpu_custom_call.1} parent=1 // pred_region
      %s327 = ssub.s32 128, 128
      %328 = vsyncadd [#allocation3], %s327
      %s330 = sshll.u32 [#allocation2], 4
      %s331 = int_to_ptr.vmem [resolvable:$true] %s330
      %333 = dma.vmem_to_hbm [thread:$0]  %s331, 128, %s5, [#allocation3]
    $region25: #{tpu_custom_call.1} parent=1 // pred_fallthru
      _
    // Predicated region
    $region26: #{tpu_custom_call.1} parent=1 // pred_check
      _
    $region27: #{tpu_custom_call.1} parent=1 // pred_check_branch
      %335 = sbr.rel (0) target = $region29
    $region28: #{tpu_custom_call.1} parent=1 // pred_region
      %336 = dma.done [#allocation3], 128
    $region29: #{tpu_custom_call.1} parent=1 // pred_fallthru
      _
    %337 = vsyncpa [#allocation3], 1

</llo_original>
